<compile_context>
chip_gen: v5e
topology: v5e:2x2
jax: 0.10.0
libtpu: 0.0.40
codegen_flags: <defaults>
</compile_context>

<pallas_src>
import jax
import jax.numpy as jnp
from jax.experimental import pallas as pl
from jax.experimental.pallas import tpu as pltpu


def _pos_embed_copy_kernel(wpos_hbm, out_hbm, sem):
    """Single DMA copying the first `seq` rows of W_pos (HBM) into the output (HBM)."""
    seq = out_hbm.shape[0]
    cp = pltpu.make_async_copy(
        wpos_hbm.at[pl.ds(0, seq), :],   # contiguous row-major prefix of W_pos
        out_hbm,                         # whole output slab
        sem,
    )
    cp.start()
    cp.wait()


def pos_embed(W_pos: jax.Array, tokens: jax.Array) -> jax.Array:
    """Returns W_pos[:seq], shape (seq, d_model) — matches PyTorch PosEmbed.forward."""
    n_ctx, d_model = W_pos.shape
    seq = tokens.shape[1]  # static at trace time
    assert seq <= n_ctx, f"seq={seq} exceeds n_ctx={n_ctx}"

    if seq == 0:
        # Empty sequence: nothing to copy.
        return jnp.zeros((0, d_model), dtype=W_pos.dtype)

    itemsize = jnp.dtype(W_pos.dtype).itemsize

    return pl.pallas_call(
        _pos_embed_copy_kernel,
        out_shape=jax.ShapeDtypeStruct((seq, d_model), W_pos.dtype),
        # No grid: one invocation, one DMA.
        in_specs=[pl.BlockSpec(memory_space=pl.ANY)],   # W_pos stays in HBM
        out_specs=pl.BlockSpec(memory_space=pl.ANY),    # output written via DMA
        scratch_shapes=[pltpu.SemaphoreType.DMA(())],
        cost_estimate=pl.CostEstimate(
            flops=0,
            transcendentals=0,
            bytes_accessed=2 * seq * d_model * itemsize,
        ),
    )(W_pos)


if __name__ == "__main__":
    # Small config consistent with the module's __init__:
    #   W_pos: (n_ctx, d_model), init ~ Normal(0, init_range)
    n_ctx = 64
    d_model = 128
    batch = 2
    seq = 8
    init_range = 0.02

    key = jax.random.PRNGKey(0)
    k_w, k_tok = jax.random.split(key)

    W_pos = (init_range * jax.random.normal(k_w, (n_ctx, d_model))).astype(jnp.float32)
    tokens = jax.random.randint(k_tok, (batch, seq), minval=0, maxval=1000, dtype=jnp.int32)

    # Primary check: seq=8.
    out = pos_embed(W_pos, tokens)
    out = jax.block_until_ready(out)
    ref = W_pos[:seq]
    assert out.shape == (seq, d_model), out.shape
    assert out.dtype == jnp.float32
    assert jnp.allclose(out, ref), "mismatch vs reference slice (seq=8)"

    # Secondary check: a non-multiple-of-8 sequence length.
    seq2 = 20
    tokens2 = jax.random.randint(k_tok, (batch, seq2), minval=0, maxval=1000, dtype=jnp.int32)
    out2 = pos_embed(W_pos, tokens2)
    out2 = jax.block_until_ready(out2)
    assert out2.shape == (seq2, d_model), out2.shape
    assert jnp.allclose(out2, W_pos[:seq2]), "mismatch vs reference slice (seq=20)"

    # Edge case: empty sequence (no pallas_call issued).
    tokens0 = jnp.zeros((batch, 0), dtype=jnp.int32)
    out0 = pos_embed(W_pos, tokens0)
    assert out0.shape == (0, d_model)

    print("KERNEL_OK")
</pallas_src>

<mosaic_0001>
module attributes {stable_mosaic.version = 11 : i64} {
  func.func @_pos_embed_copy_kernel(%arg0: memref<64x128xf32, #tpu.memory_space<any>>, %arg1: memref<8x128xf32, #tpu.memory_space<any>>, %arg2: memref<!tpu.dma_semaphore, #tpu.memory_space<semaphore_mem>>) attributes {dimension_semantics = [], scalar_prefetch = 0 : i64, scratch_operands = 1 : i64, tpu.core_type = #tpu.core_type<tc>} {
    %c0_i32 = arith.constant 0 : i32
    %c0_i32_0 = arith.constant 0 : i32
    %0 = tpu.memref_slice %arg0[%c0_i32, %c0_i32_0] : memref<64x128xf32, #tpu.memory_space<any>> -> memref<8x128xf32, #tpu.memory_space<any>>
    tpu.enqueue_dma source(%0 : memref<8x128xf32, #tpu.memory_space<any>>) target(%arg1 : memref<8x128xf32, #tpu.memory_space<any>>) target_semaphore(%arg2 : memref<!tpu.dma_semaphore, #tpu.memory_space<semaphore_mem>>)
    %c0_i32_1 = arith.constant 0 : i32
    %c0_i32_2 = arith.constant 0 : i32
    %1 = tpu.memref_slice %arg0[%c0_i32_1, %c0_i32_2] : memref<64x128xf32, #tpu.memory_space<any>> -> memref<8x128xf32, #tpu.memory_space<any>>
    tpu.wait_dma2 semaphore(%arg2 : memref<!tpu.dma_semaphore, #tpu.memory_space<semaphore_mem>>) src(%1 : memref<8x128xf32, #tpu.memory_space<any>>) dst(%arg1 : memref<8x128xf32, #tpu.memory_space<any>>)
    return
  }
}

</mosaic_0001>

<llo_original>
// kernel: tpu_custom_call.1
$region0: #{tpu_custom_call.1}
  #allocation0 [shape = 'u32[]', space=smem, size = 0x4, offset = 0x4, fixed_abs, tag = 'smem constant byte address 0x4 - core index']
  #allocation1 [shape = 'u32[72,128]{1,0:T(1,128)}', space=vmem, size = 0x9000, scoped, tag = 'internal scratch']
  #allocation2 [shape = 's32[1]{0}', space=sflag, size = 0x4, scoped, tag = 'scratch operand']
  #allocation3 [shape = 's32[]', space=sflag, size = 0x4, offset = 0, fixed_abs, tag = 'sflag constant byte address 0x0 - dummy sync flag']
  #allocation4 [shape = 'u32[0]{0}', space=smem, size = 0, offset = 0, fixed_abs, tag = 'smem constant byte address 0x0 - null']
  %s0 = inlined_call_operand.hbm [shape: f32[64,128], index: 0, kind: input, shape index: {}]
  %s1 = inlined_call_operand.hbm [shape: f32[8,128], index: 1, kind: output, shape index: {}]
  %s2 = sld [smem:[#allocation0]]
  $region2: #{tpu_custom_call.1} parent=0
    _
  %s4 = ssub.s32 1, %s2
  %s5 = scalar_select 0, %s4, %s2
  %s7 = sshll.u32 1, 14
  %s8 = sxor.u32 4294967295, %s7
  %s10 = sshll.u32 %s0, 4
  %s11 = int_to_ptr.hbm [resolvable:$true] %s10
  %s12 = sshll.u32 %s1, 4
  %s13 = int_to_ptr.hbm [resolvable:$true] %s12
  %16 = dma.general %s11, 128, %s13, [#allocation2], [#allocation3], [#allocation4], 0, 0
  %s17 = smul.u32 8, 1
  %s18 = sshll.u32 %s17, 4
  %19 = dma.done [#allocation2], %s18
  %20 = vsyncmov [#allocation2]
  %s21 = vpop.sfrf %20
  %p22 = scmp.eq.s32.totalorder %s21, 0
  %p23 = pneg %p22
  %25 = shalt.err (%p23)

</llo_original>
